<compile_context>
chip_gen: v7x
topology: tpu7x:2x2x1
jax: 0.10.0
libtpu: 0.0.40
codegen_flags: <defaults>
</compile_context>

<pallas_src>
import numpy as np
import jax
import jax.numpy as jnp
from jax.experimental import pallas as pl
from jax.experimental.pallas import tpu as pltpu


# ---------------------------------------------------------------------------
# Bicubic interpolation weight matrices (host-side numpy parameter setup)
# ---------------------------------------------------------------------------
def _cubic1(x, A):   # |x| <= 1
    return ((A + 2.0) * x - (A + 3.0)) * x * x + 1.0


def _cubic2(x, A):   # 1 < |x| < 2
    return (((x - 5.0) * x + 8.0) * x - 4.0) * A


def bicubic_weight_matrix(in_size, out_size, A=-0.75):
    """W of shape (out_size, in_size); resize along that axis is W @ x."""
    W = np.zeros((out_size, in_size), dtype=np.float32)
    scale = in_size / out_size
    for i in range(out_size):
        xs = (i + 0.5) * scale - 0.5
        x0 = int(np.floor(xs))
        t = xs - x0
        coeffs = (_cubic2(t + 1.0, A), _cubic1(t, A),
                  _cubic1(1.0 - t, A), _cubic2(2.0 - t, A))
        for k, w in enumerate(coeffs):
            idx = min(max(x0 - 1 + k, 0), in_size - 1)
            W[i, idx] += w
    return W


def resize_output_size(h, w, image_size):
    """torchvision Resize([s]): shortest side -> s, keep aspect ratio."""
    if h <= w:
        new_h = image_size
        new_w = int(image_size * w / h)
    else:
        new_w = image_size
        new_h = int(image_size * h / w)
    return new_h, new_w


def _round_up(x, m):
    return ((x + m - 1) // m) * m


def _build_transform_weights(H, W, S, mean, std, weight_dtype):
    """Cropped + fully-folded resize matrices, padded for TPU-friendly layouts.

    Returns (wh, wwt, bias, S_sub, S_lane, h_first):
      wh  : (C, S_sub, H)  = per-channel height-resize matrix * (1/255) * (1/std)
      wwt : (W, S_lane)    = width-resize matrix (cropped cols), transposed
      bias: (C,) float32   = -mean/std
      h_first: whether the kernel should apply wh before wwt.
    """
    new_h, new_w = resize_output_size(H, W, S)
    wh_full = bicubic_weight_matrix(H, new_h)
    ww_full = bicubic_weight_matrix(W, new_w)

    # CenterCrop(image_size) folded into the interpolation matrices.
    top = int(round((new_h - S) / 2.0))
    left = int(round((new_w - S) / 2.0))
    wh_c = wh_full[top:top + S, :]                 # (S, H)
    wwt_c = ww_full[left:left + S, :].T            # (W, S)

    # Pad output rows to a sublane multiple; pad output lanes to a multiple of
    # 128 only when the overhead is modest (e.g. 224 -> 256), for unmasked vst.
    S_sub = _round_up(S, 8)
    pad_lane = _round_up(S, 128) - S
    S_lane = S + pad_lane if (pad_lane > 0 and 2 * pad_lane <= S) else S

    mean_arr = np.asarray(mean, dtype=np.float32)
    std_arr = np.asarray(std, dtype=np.float32)
    C = mean_arr.shape[0]
    scale = (np.float32(1.0 / 255.0) / std_arr)            # (C,)
    bias = -mean_arr / std_arr                              # (C,)

    wh_pad = np.zeros((C, S_sub, H), dtype=np.float32)
    wh_pad[:, :S, :] = scale[:, None, None] * wh_c[None, :, :]
    wwt_pad = np.zeros((W, S_lane), dtype=np.float32)
    wwt_pad[:, :S] = wwt_c

    # Reduce the longer spatial axis first: cost S*W*(H+S) vs S*H*(W+S).
    h_first = H >= W

    return (jnp.asarray(wh_pad, dtype=weight_dtype),
            jnp.asarray(wwt_pad, dtype=weight_dtype),
            jnp.asarray(bias, dtype=jnp.float32),
            S_sub, S_lane, h_first)


# ---------------------------------------------------------------------------
# Pallas kernel: one grid step per image (all channels fused)
# ---------------------------------------------------------------------------
def _make_transform_kernel(num_channels, h_first, compute_dtype):
    def kernel(bias_ref, x_ref, wh_ref, wwt_ref, o_ref):
        # x_ref  : (C, H, W) uint8
        # wh_ref : (C, S_sub, H)  (1/255 and 1/std folded per channel)
        # wwt_ref: (W, S_lane)
        # o_ref  : (C, S_sub, S_lane) float32
        wwt = wwt_ref[...]
        for c in range(num_channels):        # static unroll (C is tiny)
            # uint8 values (0..255) are exact in bf16; 1/255 is folded into wh.
            xc = x_ref[c].astype(jnp.float32).astype(compute_dtype)   # (H, W)
            whc = wh_ref[c]                                           # (S_sub, H)
            if h_first:
                t = jnp.dot(whc, xc, preferred_element_type=jnp.float32)      # (S_sub, W)
                y = jnp.dot(t.astype(compute_dtype), wwt,
                            preferred_element_type=jnp.float32)               # (S_sub, S_lane)
            else:
                t = jnp.dot(xc, wwt, preferred_element_type=jnp.float32)      # (H, S_lane)
                y = jnp.dot(whc, t.astype(compute_dtype),
                            preferred_element_type=jnp.float32)               # (S_sub, S_lane)
            # Normalize: (resize(x)/255 - mean)/std == (folded-scale matmul) + bias
            o_ref[c] = y + bias_ref[c]
    return kernel


def transform_forward(x_u8, image_size, mean, std, weight_dtype=jnp.bfloat16):
    """x_u8: (N, C, H, W) uint8 -> (N, C, image_size, image_size) float32."""
    N, C, H, W = x_u8.shape
    S = image_size

    wh, wwt, bias, S_sub, S_lane, h_first = _build_transform_weights(
        H, W, S, mean, std, weight_dtype)

    kernel = _make_transform_kernel(C, h_first, weight_dtype)
    sq = pl.Squeezed()
    wbytes = jnp.dtype(weight_dtype).itemsize

    # VMEM budget: raise the scoped limit only when needed (cap at v7x physical 64 MiB).
    est = 2 * C * H * W                                   # input plane, double-buffered (u8)
    est += 2 * (C * S_sub * H + W * S_lane) * wbytes      # weight matrices
    est += 2 * C * S_sub * S_lane * 4                     # output block, double-buffered (f32)
    est += C * max(S_sub * W, H * S_lane) * 6             # intermediates (f32 + bf16 copy)
    est += 2 << 20                                        # slack
    cp_kwargs = {}
    if est > (32 << 20):
        cp_kwargs["vmem_limit_bytes"] = min(int(est * 1.25), 64 << 20)

    # Advisory cost estimate for XLA scheduling around the custom call.
    if h_first:
        fl = 2 * (S_sub * H * W + S_sub * W * S_lane)
    else:
        fl = 2 * (H * W * S_lane + S_sub * H * S_lane)
    cost = pl.CostEstimate(
        flops=int(N * C * fl),
        transcendentals=0,
        bytes_accessed=int(N * C * (H * W + S_sub * S_lane * 4)
                           + (C * S_sub * H + W * S_lane) * wbytes))

    out = pl.pallas_call(
        kernel,
        out_shape=jax.ShapeDtypeStruct((N, C, S_sub, S_lane), jnp.float32),
        grid=(N,),
        in_specs=[
            pl.BlockSpec(memory_space=pltpu.MemorySpace.SMEM),          # bias (C,)
            pl.BlockSpec((sq, C, H, W), lambda n: (n, 0, 0, 0)),        # image (all channels)
            pl.BlockSpec((C, S_sub, H), lambda n: (0, 0, 0)),           # Wh (cropped, scaled)
            pl.BlockSpec((W, S_lane), lambda n: (0, 0)),                # Ww^T (cropped)
        ],
        out_specs=pl.BlockSpec((sq, C, S_sub, S_lane), lambda n: (n, 0, 0, 0)),
        compiler_params=pltpu.CompilerParams(
            dimension_semantics=("parallel",), **cp_kwargs),
        cost_estimate=cost,
    )(bias, x_u8, wh, wwt)

    if S_sub != S or S_lane != S:
        out = out[:, :, :S, :S]
    return out


# ---------------------------------------------------------------------------
# Pure-JAX references (for correctness checks only)
# ---------------------------------------------------------------------------
def transform_reference_f32(x_u8, image_size, mean, std):
    """Exact (f32, highest precision) torchvision tensor-bicubic semantics."""
    N, C, H, W = x_u8.shape
    S = image_size
    new_h, new_w = resize_output_size(H, W, S)
    wh_full = bicubic_weight_matrix(H, new_h)
    ww_full = bicubic_weight_matrix(W, new_w)
    top = int(round((new_h - S) / 2.0))
    left = int(round((new_w - S) / 2.0))
    wh_c = jnp.asarray(wh_full[top:top + S, :])
    wwt_c = jnp.asarray(ww_full[left:left + S, :].T)
    hp = jax.lax.Precision.HIGHEST
    xf = x_u8.astype(jnp.float32) / 255.0
    tmp = jnp.einsum("oh,nchw->ncow", wh_c, xf, precision=hp)
    y = jnp.einsum("ncow,wp->ncop", tmp, wwt_c, precision=hp)
    m = jnp.asarray(mean, jnp.float32)[None, :, None, None]
    s = jnp.asarray(std, jnp.float32)[None, :, None, None]
    return (y - m) / s


def transform_reference_kernel_math(x_u8, image_size, mean, std,
                                    weight_dtype=jnp.bfloat16):
    """Mirrors the kernel's arithmetic (folded 1/255 & 1/std, quantized weights,
    matmul order and intermediate cast) — tighter check of the Pallas plumbing."""
    N, C, H, W = x_u8.shape
    S = image_size
    wh, wwt, bias, S_sub, S_lane, h_first = _build_transform_weights(
        H, W, S, mean, std, weight_dtype)
    hp = jax.lax.Precision.HIGHEST
    xf = x_u8.astype(jnp.float32)
    whf = wh.astype(jnp.float32)      # (C, S_sub, H)
    wwtf = wwt.astype(jnp.float32)    # (W, S_lane)
    if h_first:
        t = jnp.einsum("csh,nchw->ncsw", whf, xf, precision=hp)
        t = t.astype(weight_dtype).astype(jnp.float32)
        y = jnp.einsum("ncsw,wt->ncst", t, wwtf, precision=hp)
    else:
        t = jnp.einsum("nchw,wt->ncht", xf, wwtf, precision=hp)
        t = t.astype(weight_dtype).astype(jnp.float32)
        y = jnp.einsum("csh,ncht->ncst", whf, t, precision=hp)
    out = y + bias[None, :, None, None]
    return out[:, :, :S, :S]


if __name__ == "__main__":
    key = jax.random.PRNGKey(0)
    N, C, H, W = 2, 3, 20, 28
    image_size = 16
    mean = [0.48145466, 0.4578275, 0.40821073]
    std = [0.26862954, 0.26130258, 0.27577711]

    x = jax.random.randint(key, (N, C, H, W), 0, 256, dtype=jnp.int32).astype(jnp.uint8)

    out = transform_forward(x, image_size, mean, std)
    out = jax.block_until_ready(out)

    assert out.shape == (N, C, image_size, image_size)
    assert out.dtype == jnp.float32

    # Tight check vs a reference that mirrors the kernel's (bf16-weight) math.
    ref_mirror = jax.block_until_ready(
        transform_reference_kernel_math(x, image_size, mean, std))
    np.testing.assert_allclose(np.asarray(out), np.asarray(ref_mirror),
                               atol=2e-2, rtol=2e-2)

    # Semantic check vs the exact f32 transform (bf16 MXU weights -> loose tol).
    ref_true = jax.block_until_ready(
        transform_reference_f32(x, image_size, mean, std))
    np.testing.assert_allclose(np.asarray(out), np.asarray(ref_true),
                               atol=5e-2, rtol=5e-2)

    print("KERNEL_OK")
</pallas_src>

<mosaic_0001>
module attributes {stable_mosaic.version = 11 : i64} {
  func.func @kernel(%arg0: i32, %arg1: memref<3xf32, #tpu.memory_space<smem>>, %arg2: memref<1x3x20x28xi8, #tpu.memory_space<vmem>>, %arg3: memref<3x16x20xbf16, #tpu.memory_space<vmem>>, %arg4: memref<28x16xbf16, #tpu.memory_space<vmem>>, %arg5: memref<1x3x16x16xf32, #tpu.memory_space<vmem>>) attributes {dimension_semantics = [#tpu.dimension_semantics<parallel>], iteration_bounds = array<i64: 2>, scalar_prefetch = 0 : i64, scratch_operands = 0 : i64, tpu.core_type = #tpu.core_type<tc>, window_params = [{transform_indices = @transform_0, window_bounds = array<i64: 3>}, {transform_indices = @transform_1, window_bounds = array<i64: 1, 3, 20, 28>}, {pipeline_mode = #tpu.pipeline_mode<synchronous>, transform_indices = @transform_2, window_bounds = array<i64: 3, 16, 20>}, {pipeline_mode = #tpu.pipeline_mode<synchronous>, transform_indices = @transform_3, window_bounds = array<i64: 28, 16>}, {transform_indices = @transform_4, window_bounds = array<i64: 1, 3, 16, 16>}]} {
    %c0 = arith.constant 0 : index
    %c0_0 = arith.constant 0 : index
    %0 = vector.load %arg4[%c0, %c0_0] : memref<28x16xbf16, #tpu.memory_space<vmem>>, vector<28x16xbf16>
    %c0_1 = arith.constant 0 : index
    %c0_2 = arith.constant 0 : index
    %c0_3 = arith.constant 0 : index
    %c0_4 = arith.constant 0 : index
    %1 = vector.load %arg2[%c0_1, %c0_2, %c0_3, %c0_4] : memref<1x3x20x28xi8, #tpu.memory_space<vmem>>, vector<1x1x20x28xi8>
    %2 = vector.shape_cast %1 : vector<1x1x20x28xi8> to vector<20x28xi8>
    %3 = arith.uitofp %2 : vector<20x28xi8> to vector<20x28xf32>
    %4 = arith.truncf %3 : vector<20x28xf32> to vector<20x28xbf16>
    %c0_5 = arith.constant 0 : index
    %c0_6 = arith.constant 0 : index
    %c0_7 = arith.constant 0 : index
    %5 = vector.load %arg3[%c0_5, %c0_6, %c0_7] : memref<3x16x20xbf16, #tpu.memory_space<vmem>>, vector<1x16x20xbf16>
    %6 = vector.shape_cast %5 : vector<1x16x20xbf16> to vector<16x20xbf16>
    %cst = arith.constant dense<0.000000e+00> : vector<20x16xf32>
    %7 = tpu.matmul %4, %0, %cst {dimension_numbers = #tpu.dot_dimension_numbers<[1], [0], [0], [1], [0, 0, 1, 1], [], []>} : vector<20x28xbf16>, vector<28x16xbf16>, vector<20x16xf32> -> vector<20x16xf32>
    %8 = arith.truncf %7 : vector<20x16xf32> to vector<20x16xbf16>
    %cst_8 = arith.constant dense<0.000000e+00> : vector<16x16xf32>
    %9 = tpu.matmul %6, %8, %cst_8 {dimension_numbers = #tpu.dot_dimension_numbers<[1], [0], [0], [1], [0, 0, 1, 1], [], []>} : vector<16x20xbf16>, vector<20x16xbf16>, vector<16x16xf32> -> vector<16x16xf32>
    %c0_9 = arith.constant 0 : index
    %10 = memref.load %arg1[%c0_9] : memref<3xf32, #tpu.memory_space<smem>>
    %11 = vector.broadcast %10 : f32 to vector<16x16xf32>
    %12 = arith.addf %9, %11 : vector<16x16xf32>
    %c0_10 = arith.constant 0 : index
    %c0_11 = arith.constant 0 : index
    %c0_12 = arith.constant 0 : index
    %c0_13 = arith.constant 0 : index
    %13 = vector.load %arg5[%c0_10, %c0_11, %c0_12, %c0_13] : memref<1x3x16x16xf32, #tpu.memory_space<vmem>>, vector<1x1x16x16xf32>
    %14 = vector.shape_cast %13 : vector<1x1x16x16xf32> to vector<16x16xf32>
    %15 = vector.shape_cast %12 : vector<16x16xf32> to vector<1x1x16x16xf32>
    tpu.vector_store %arg5[%c0_10, %c0_11, %c0_12, %c0_13], %15 {strides = array<i32>} : memref<1x3x16x16xf32, #tpu.memory_space<vmem>>, vector<1x1x16x16xf32>,
    %c0_14 = arith.constant 0 : index
    %c1 = arith.constant 1 : index
    %c0_15 = arith.constant 0 : index
    %c0_16 = arith.constant 0 : index
    %16 = vector.load %arg2[%c0_14, %c1, %c0_15, %c0_16] : memref<1x3x20x28xi8, #tpu.memory_space<vmem>>, vector<1x1x20x28xi8>
    %17 = vector.shape_cast %16 : vector<1x1x20x28xi8> to vector<20x28xi8>
    %18 = arith.uitofp %17 : vector<20x28xi8> to vector<20x28xf32>
    %19 = arith.truncf %18 : vector<20x28xf32> to vector<20x28xbf16>
    %c1_17 = arith.constant 1 : index
    %c0_18 = arith.constant 0 : index
    %c0_19 = arith.constant 0 : index
    %20 = vector.load %arg3[%c1_17, %c0_18, %c0_19] : memref<3x16x20xbf16, #tpu.memory_space<vmem>>, vector<1x16x20xbf16>
    %21 = vector.shape_cast %20 : vector<1x16x20xbf16> to vector<16x20xbf16>
    %cst_20 = arith.constant dense<0.000000e+00> : vector<20x16xf32>
    %22 = tpu.matmul %19, %0, %cst_20 {dimension_numbers = #tpu.dot_dimension_numbers<[1], [0], [0], [1], [0, 0, 1, 1], [], []>} : vector<20x28xbf16>, vector<28x16xbf16>, vector<20x16xf32> -> vector<20x16xf32>
    %23 = arith.truncf %22 : vector<20x16xf32> to vector<20x16xbf16>
    %cst_21 = arith.constant dense<0.000000e+00> : vector<16x16xf32>
    %24 = tpu.matmul %21, %23, %cst_21 {dimension_numbers = #tpu.dot_dimension_numbers<[1], [0], [0], [1], [0, 0, 1, 1], [], []>} : vector<16x20xbf16>, vector<20x16xbf16>, vector<16x16xf32> -> vector<16x16xf32>
    %c1_22 = arith.constant 1 : index
    %25 = memref.load %arg1[%c1_22] : memref<3xf32, #tpu.memory_space<smem>>
    %26 = vector.broadcast %25 : f32 to vector<16x16xf32>
    %27 = arith.addf %24, %26 : vector<16x16xf32>
    %c0_23 = arith.constant 0 : index
    %c1_24 = arith.constant 1 : index
    %c0_25 = arith.constant 0 : index
    %c0_26 = arith.constant 0 : index
    %28 = vector.load %arg5[%c0_23, %c1_24, %c0_25, %c0_26] : memref<1x3x16x16xf32, #tpu.memory_space<vmem>>, vector<1x1x16x16xf32>
    %29 = vector.shape_cast %28 : vector<1x1x16x16xf32> to vector<16x16xf32>
    %30 = vector.shape_cast %27 : vector<16x16xf32> to vector<1x1x16x16xf32>
    tpu.vector_store %arg5[%c0_23, %c1_24, %c0_25, %c0_26], %30 {strides = array<i32>} : memref<1x3x16x16xf32, #tpu.memory_space<vmem>>, vector<1x1x16x16xf32>,
    %c0_27 = arith.constant 0 : index
    %c2 = arith.constant 2 : index
    %c0_28 = arith.constant 0 : index
    %c0_29 = arith.constant 0 : index
    %31 = vector.load %arg2[%c0_27, %c2, %c0_28, %c0_29] : memref<1x3x20x28xi8, #tpu.memory_space<vmem>>, vector<1x1x20x28xi8>
    %32 = vector.shape_cast %31 : vector<1x1x20x28xi8> to vector<20x28xi8>
    %33 = arith.uitofp %32 : vector<20x28xi8> to vector<20x28xf32>
    %34 = arith.truncf %33 : vector<20x28xf32> to vector<20x28xbf16>
    %c2_30 = arith.constant 2 : index
    %c0_31 = arith.constant 0 : index
    %c0_32 = arith.constant 0 : index
    %35 = vector.load %arg3[%c2_30, %c0_31, %c0_32] : memref<3x16x20xbf16, #tpu.memory_space<vmem>>, vector<1x16x20xbf16>
    %36 = vector.shape_cast %35 : vector<1x16x20xbf16> to vector<16x20xbf16>
    %cst_33 = arith.constant dense<0.000000e+00> : vector<20x16xf32>
    %37 = tpu.matmul %34, %0, %cst_33 {dimension_numbers = #tpu.dot_dimension_numbers<[1], [0], [0], [1], [0, 0, 1, 1], [], []>} : vector<20x28xbf16>, vector<28x16xbf16>, vector<20x16xf32> -> vector<20x16xf32>
    %38 = arith.truncf %37 : vector<20x16xf32> to vector<20x16xbf16>
    %cst_34 = arith.constant dense<0.000000e+00> : vector<16x16xf32>
    %39 = tpu.matmul %36, %38, %cst_34 {dimension_numbers = #tpu.dot_dimension_numbers<[1], [0], [0], [1], [0, 0, 1, 1], [], []>} : vector<16x20xbf16>, vector<20x16xbf16>, vector<16x16xf32> -> vector<16x16xf32>
    %c2_35 = arith.constant 2 : index
    %40 = memref.load %arg1[%c2_35] : memref<3xf32, #tpu.memory_space<smem>>
    %41 = vector.broadcast %40 : f32 to vector<16x16xf32>
    %42 = arith.addf %39, %41 : vector<16x16xf32>
    %c0_36 = arith.constant 0 : index
    %c2_37 = arith.constant 2 : index
    %c0_38 = arith.constant 0 : index
    %c0_39 = arith.constant 0 : index
    %43 = vector.load %arg5[%c0_36, %c2_37, %c0_38, %c0_39] : memref<1x3x16x16xf32, #tpu.memory_space<vmem>>, vector<1x1x16x16xf32>
    %44 = vector.shape_cast %43 : vector<1x1x16x16xf32> to vector<16x16xf32>
    %45 = vector.shape_cast %42 : vector<16x16xf32> to vector<1x1x16x16xf32>
    tpu.vector_store %arg5[%c0_36, %c2_37, %c0_38, %c0_39], %45 {strides = array<i32>} : memref<1x3x16x16xf32, #tpu.memory_space<vmem>>, vector<1x1x16x16xf32>,
    return
  }
  func.func @transform_0(%arg0: i32) -> i32 {
    %c0_i32 = arith.constant 0 : i32
    %c0_i32_0 = arith.constant 0 : i32
    return %c0_i32 : i32
  }
  func.func @transform_1(%arg0: i32) -> (i32, i32, i32, i32) {
    %c0_i32 = arith.constant 0 : i32
    %c0_i32_0 = arith.constant 0 : i32
    %c0_i32_1 = arith.constant 0 : i32
    %c0_i32_2 = arith.constant 0 : i32
    return %arg0, %c0_i32, %c0_i32_0, %c0_i32_1 : i32, i32, i32, i32
  }
  func.func @transform_2(%arg0: i32) -> (i32, i32, i32) {
    %c0_i32 = arith.constant 0 : i32
    %c0_i32_0 = arith.constant 0 : i32
    %c0_i32_1 = arith.constant 0 : i32
    %c0_i32_2 = arith.constant 0 : i32
    return %c0_i32, %c0_i32_0, %c0_i32_1 : i32, i32, i32
  }
  func.func @transform_3(%arg0: i32) -> (i32, i32) {
    %c0_i32 = arith.constant 0 : i32
    %c0_i32_0 = arith.constant 0 : i32
    %c0_i32_1 = arith.constant 0 : i32
    return %c0_i32, %c0_i32_0 : i32, i32
  }
  func.func @transform_4(%arg0: i32) -> (i32, i32, i32, i32) {
    %c0_i32 = arith.constant 0 : i32
    %c0_i32_0 = arith.constant 0 : i32
    %c0_i32_1 = arith.constant 0 : i32
    %c0_i32_2 = arith.constant 0 : i32
    return %arg0, %c0_i32, %c0_i32_0, %c0_i32_1 : i32, i32, i32, i32
  }
}

</mosaic_0001>

<llo_original>
// kernel: tpu_custom_call.1
$region0: #{tpu_custom_call.1}
  #allocation0 [shape = 'u32[]', space=smem, size = 0x4, offset = 0x4, fixed_abs, tag = 'smem constant byte address 0x4 - core index']
  #allocation1 [shape = 'u32[144,128]{1,0:T(1,128)}', space=vmem, size = 0x12000, scoped, tag = 'internal scratch']
  %s0 = inlined_call_operand.vmem [shape: f32[3], index: 0, kind: input, shape index: {}]
  %s1 = inlined_call_operand.hbm [shape: u8[2,3,20,28], index: 1, kind: input, shape index: {}]
  %s2 = inlined_call_operand.vmem [shape: bf16[3,16,20], index: 2, kind: input, shape index: {}]
  %s3 = inlined_call_operand.vmem [shape: bf16[28,16], index: 3, kind: input, shape index: {}]
  %s4 = inlined_call_operand.hbm [shape: f32[2,3,16,16], index: 4, kind: output, shape index: {}]
  %s5 = sld [smem:[#allocation0]]
  $region57: #{tpu_custom_call.1} parent=0
    _
  %s7 = ssub.s32 1, %s5
  %s8 = scalar_select 0, %s7, %s5
  $region1: #{tpu_custom_call.1} parent=0
    #allocation2 [shape = 'u8[512]{0}', space=smem, size = 0x200, scoped, tag = 'input window, operand 0, single buffered']
    #allocation3 [shape = 's32[2]{0}', space=sflag, size = 0x8, scoped, tag = 'scoped memory for tpu_custom_call.1']
    #allocation4 [shape = 's32[2]{0}', space=sflag, size = 0x8, scoped, tag = 'scoped memory for tpu_custom_call.1']
    #allocation5 [shape = 's32[2]{0}', space=sflag, size = 0x8, scoped, tag = 'scoped memory for tpu_custom_call.1']
    #allocation6 [shape = 'u8[18432]{0}', space=vmem, size = 0x4800, scoped, tag = 'input window, operand 1']
    #allocation7 [shape = 'u8[49152]{0}', space=vmem, size = 0xc000, scoped, tag = 'output window, operand 0']
    %9 = vsyncpa [#allocation5], 0
    %10 = vsyncpa [#allocation3], 0
    %s11 = scalar_lea.sflag [#allocation3], 1
    %12 = vsyncpa %s11, 0
    %13 = vsyncpa [#allocation4], 0
    %s14 = scalar_lea.sflag [#allocation4], 1
    %15 = vsyncpa %s14, 0
    loop: start=0, step=1, limit=4
    $region2: #{tpu_custom_call.1} parent=1 // loop_pre_header
      _
    $region3: #{tpu_custom_call.1} parent=1 // loop_header
      %s17 = sphi 0, %s21
      %p18 = scmp.ge.s32.totalorder %s17, 4
      %s25 = sphi 0, %s25
      %s27 = sphi 0, %s25
      %s28 = sphi 0, %s27
      %s42 = sphi 0, %s28
      %s48 = sphi 0, %s50
      %s51 = sphi 0, %s48
      %s52 = sphi 0, %s51
      %s68 = sphi 0, %s52
      %s72 = sphi 0, %s72
      %s74 = sphi 0, %s72
      %s75 = sphi 0, %s74
      %s89 = sphi 0, %s75
      %s93 = sphi 0, %s93
      %s95 = sphi 0, %s93
      %s96 = sphi 0, %s95
      %s110 = sphi 0, %s96
      %s116 = sphi 0, %s118
      %s119 = sphi 0, %s116
      %s120 = sphi 0, %s119
      %s136 = sphi 0, %s120
    $region4: #{tpu_custom_call.1} parent=1 // loop_header_branch
      %20 = sbr.rel (%p18) target = $region8
    $region5: #{tpu_custom_call.1} parent=1 // loop_body
      %s22 = ssub.s32 %s17, 1
      %s23 = ssub.s32 %s17, 2
      %s24 = sadd.s32 %s17, 1
      %s26 = sadd.s32 %s25, 1
      %p29 = scmp.eq.s32.totalorder %s17, 1
      %p30 = scmp.ne.s32.totalorder %s25, %s27
      %p31 = scmp.eq.s32.totalorder %s17, 0
      %p32 = por %p30, %p31
      %p33 = scmp.ne.s32.totalorder %s25, %s27
      %p34 = scmp.eq.s32.totalorder %s22, 1
      %p35 = por %p33, %p34
      %p36 = scmp.ne.s32.totalorder %s27, %s28
      %p37 = scmp.eq.s32.totalorder %s22, 0
      %p38 = por %p36, %p37
      %p39 = scmp.ne.s32.totalorder %s27, %s28
      %p40 = scmp.eq.s32.totalorder %s23, 1
      %p41 = por %p39, %p40
      %p43 = scmp.ne.s32.totalorder %s28, %s42
      %p44 = scmp.eq.s32.totalorder %s23, 0
      %p45 = por %p43, %p44
      %s46 = ssub.s32 %s17, %s24
      %p47 = scmp.eq.s32.totalorder %s46, 0
      %s49 = sadd.s32 %s48, 1
      %s50 = scalar_select %p47, %s48, %s49
      %p53 = pneg %p47
      %p54 = scmp.eq.s32.totalorder %s17, 1
      %p55 = por %p53, %p54
      %p56 = scmp.ne.s32.totalorder %s48, %s51
      %p57 = scmp.eq.s32.totalorder %s17, 0
      %p58 = por %p56, %p57
      %p59 = scmp.ne.s32.totalorder %s48, %s51
      %p60 = scmp.eq.s32.totalorder %s22, 1
      %p61 = por %p59, %p60
      %p62 = scmp.ne.s32.totalorder %s51, %s52
      %p63 = scmp.eq.s32.totalorder %s22, 0
      %p64 = por %p62, %p63
      %p65 = scmp.ne.s32.totalorder %s51, %s52
      %p66 = scmp.eq.s32.totalorder %s23, 1
      %p67 = por %p65, %p66
      %p69 = scmp.ne.s32.totalorder %s52, %s68
      %p70 = scmp.eq.s32.totalorder %s23, 0
      %p71 = por %p69, %p70
      %s73 = sadd.s32 %s72, 1
      %p76 = scmp.eq.s32.totalorder %s17, 1
      %p77 = scmp.ne.s32.totalorder %s72, %s74
      %p78 = scmp.eq.s32.totalorder %s17, 0
      %p79 = por %p77, %p78
      %p80 = scmp.ne.s32.totalorder %s72, %s74
      %p81 = scmp.eq.s32.totalorder %s22, 1
      %p82 = por %p80, %p81
      %p83 = scmp.ne.s32.totalorder %s74, %s75
      %p84 = scmp.eq.s32.totalorder %s22, 0
      %p85 = por %p83, %p84
      %p86 = scmp.ne.s32.totalorder %s74, %s75
      %p87 = scmp.eq.s32.totalorder %s23, 1
      %p88 = por %p86, %p87
      %p90 = scmp.ne.s32.totalorder %s75, %s89
      %p91 = scmp.eq.s32.totalorder %s23, 0
      %p92 = por %p90, %p91
      %s94 = sadd.s32 %s93, 1
      %p97 = scmp.eq.s32.totalorder %s17, 1
      %p98 = scmp.ne.s32.totalorder %s93, %s95
      %p99 = scmp.eq.s32.totalorder %s17, 0
      %p100 = por %p98, %p99
      %p101 = scmp.ne.s32.totalorder %s93, %s95
      %p102 = scmp.eq.s32.totalorder %s22, 1
      %p103 = por %p101, %p102
      %p104 = scmp.ne.s32.totalorder %s95, %s96
      %p105 = scmp.eq.s32.totalorder %s22, 0
      %p106 = por %p104, %p105
      %p107 = scmp.ne.s32.totalorder %s95, %s96
      %p108 = scmp.eq.s32.totalorder %s23, 1
      %p109 = por %p107, %p108
      %p111 = scmp.ne.s32.totalorder %s96, %s110
      %p112 = scmp.eq.s32.totalorder %s23, 0
      %p113 = por %p111, %p112
      %s114 = ssub.s32 %s17, %s24
      %p115 = scmp.eq.s32.totalorder %s114, 0
      %s117 = sadd.s32 %s116, 1
      %s118 = scalar_select %p115, %s116, %s117
      %p121 = pneg %p115
      %p122 = scmp.eq.s32.totalorder %s17, 1
      %p123 = por %p121, %p122
      %p124 = scmp.ne.s32.totalorder %s116, %s119
      %p125 = scmp.eq.s32.totalorder %s17, 0
      %p126 = por %p124, %p125
      %p127 = scmp.ne.s32.totalorder %s116, %s119
      %p128 = scmp.eq.s32.totalorder %s22, 1
      %p129 = por %p127, %p128
      %p130 = scmp.ne.s32.totalorder %s119, %s120
      %p131 = scmp.eq.s32.totalorder %s22, 0
      %p132 = por %p130, %p131
      %p133 = scmp.ne.s32.totalorder %s119, %s120
      %p134 = scmp.eq.s32.totalorder %s23, 1
      %p135 = por %p133, %p134
      %p137 = scmp.ne.s32.totalorder %s120, %s136
      %p138 = scmp.eq.s32.totalorder %s23, 0
      %p139 = por %p137, %p138
      %p140 = scmp.le.s32.totalorder 1, %s17
      %p141 = scmp.lt.s32.totalorder %s17, 3
      %p142 = pnand %p140, %p141
      %p143 = pneg %p142
      // Predicated region
      $region9: #{tpu_custom_call.1} parent=5 // pred_check
        _
      $region10: #{tpu_custom_call.1} parent=5 // pred_check_branch
        %145 = sbr.rel (%p142) target = $region12
      $region11: #{tpu_custom_call.1} parent=5 // pred_region
        %s146 = ssub.s32 %s17, 1
        // Predicated region
        $region13: #{tpu_custom_call.1} parent=11 // pred_check
          %p147 = pneg %p38
        $region14: #{tpu_custom_call.1} parent=11 // pred_check_branch
          %149 = sbr.rel (%p147) target = $region16
        $region15: #{tpu_custom_call.1} parent=11 // pred_region
          %s151 = ssub.s32 16, 16
          %152 = vsyncadd [#allocation5], %s151
          %s154 = sshll.u32 %s0, 4
          %s155 = int_to_ptr.vmem [resolvable:$true] %s154
          %157 = dma.vmem_to_smem %s155, 16, [#allocation2], [#allocation5]
        $region16: #{tpu_custom_call.1} parent=11 // pred_fallthru
          _
        // Predicated region
        $region17: #{tpu_custom_call.1} parent=11 // pred_check
          %p158 = pneg %p85
        $region18: #{tpu_custom_call.1} parent=11 // pred_check_branch
          %160 = sbr.rel (%p158) target = $region20
        $region19: #{tpu_custom_call.1} parent=11 // pred_region
          _
        $region20: #{tpu_custom_call.1} parent=11 // pred_fallthru
          _
        // Predicated region
        $region21: #{tpu_custom_call.1} parent=11 // pred_check
          %p161 = pneg %p106
        $region22: #{tpu_custom_call.1} parent=11 // pred_check_branch
          %163 = sbr.rel (%p161) target = $region24
        $region23: #{tpu_custom_call.1} parent=11 // pred_region
          _
        $region24: #{tpu_custom_call.1} parent=11 // pred_fallthru
          _
      $region12: #{tpu_custom_call.1} parent=5 // pred_fallthru
        _
      %p164 = scmp.lt.s32.totalorder %s17, 2
      // Predicated region
      $region25: #{tpu_custom_call.1} parent=5 // pred_check
        %p165 = pneg %p164
      $region26: #{tpu_custom_call.1} parent=5 // pred_check_branch
        %167 = sbr.rel (%p165) target = $region28
      $region27: #{tpu_custom_call.1} parent=5 // pred_region
        // Predicated region
        $region29: #{tpu_custom_call.1} parent=27 // pred_check
          %p168 = pneg %p58
        $region30: #{tpu_custom_call.1} parent=27 // pred_check_branch
          %170 = sbr.rel (%p168) target = $region32
        $region31: #{tpu_custom_call.1} parent=27 // pred_region
          %s171 = sand.u32 %s48, 1
          %s172 = scalar_lea.sflag [#allocation3], %s171
          %s173 = sand.u32 %s48, 1
          %s174 = smul.addr %s173, 18
          %s175 = scalar_lea.vmem [#allocation6], %s174
          %s177 = ssub.s32 288, 288
          %178 = vsyncadd %s172, %s177
          %s179 = smul.addr %s17, 9
          %s180 = smul.addr %s179, 32
          %s181 = scalar_lea.hbm %s1, %s180
          %s182 = sshll.u32 %s175, 4
          %s183 = int_to_ptr.vmem [resolvable:$true] %s182
          %188 = dma.hbm_to_vmem [thread:$0]  %s181, 288, %s183, %s172, 32, 32, 2
        $region32: #{tpu_custom_call.1} parent=27 // pred_fallthru
          _
      $region28: #{tpu_custom_call.1} parent=5 // pred_fallthru
        _
      %p189 = scmp.le.s32.totalorder 1, %s17
      %p190 = scmp.lt.s32.totalorder %s17, 3
      %p191 = pnand %p189, %p190
      %p192 = pneg %p191
      // Predicated region
      $region33: #{tpu_custom_call.1} parent=5 // pred_check
        _
      $region34: #{tpu_custom_call.1} parent=5 // pred_check_branch
        %194 = sbr.rel (%p191) target = $region36
      $region35: #{tpu_custom_call.1} parent=5 // pred_region
        %s195 = ssub.s32 %s17, 1
        // Predicated region
        $region37: #{tpu_custom_call.1} parent=35 // pred_check
          %p196 = pneg %p38
        $region38: #{tpu_custom_call.1} parent=35 // pred_check_branch
          %198 = sbr.rel (%p196) target = $region40
        $region39: #{tpu_custom_call.1} parent=35 // pred_region
          %199 = dma.done [#allocation5], 16
        $region40: #{tpu_custom_call.1} parent=35 // pred_fallthru
          _
        %s200 = sand.u32 %s51, 1
        %s201 = scalar_lea.sflag [#allocation3], %s200
        %s202 = sand.u32 %s51, 1
        %s203 = smul.addr %s202, 18
        %s204 = scalar_lea.vmem [#allocation6], %s203
        // Predicated region
        $region41: #{tpu_custom_call.1} parent=35 // pred_check
          %p205 = pneg %p64
        $region42: #{tpu_custom_call.1} parent=35 // pred_check_branch
          %207 = sbr.rel (%p205) target = $region44
        $region43: #{tpu_custom_call.1} parent=35 // pred_region
          %208 = dma.done %s201, 288
        $region44: #{tpu_custom_call.1} parent=35 // pred_fallthru
          _
        %209 = sfence
        %p210 = pneg %p38
        %p211 = pneg %p35
        %s212 = sand.u32 %s51, 1
        %s213 = scalar_lea.sflag [#allocation3], %s212
        %s214 = sand.u32 %s51, 1
        %s215 = smul.addr %s214, 18
        %s216 = scalar_lea.vmem [#allocation6], %s215
        %p217 = pneg %p64
        %p218 = pneg %p61
        %p219 = pneg %p85
        %p220 = pneg %p82
        %p221 = pneg %p106
        %p222 = pneg %p103
        %p223 = pneg %p132
        %p224 = pneg %p129
        %s225 = sand.u32 %s119, 1
        %s226 = scalar_lea.sflag [#allocation4], %s225
        %s227 = sand.u32 %s119, 1
        %s228 = smul.addr %s227, 48
        %s229 = scalar_lea.vmem [#allocation7], %s228
        %v231 = vld [vmem:[%s3] sm:$0xf]
        %v232 = vld [vmem:[%s3 + $0x4] sm:$0xf]
        %v233 = vld [vmem:[%s3 + $0x8] sm:$0xf]
        %v234 = vld [vmem:[%s3 + $0xc] sm:$0x3]
        %v235 = vld [vmem:[%s204] sm:$0x3]
        %v236 = vld [vmem:[%s204 + $0x2] sm:$0x3]
        %v237 = vld [vmem:[%s204 + $0x4] sm:$0x1]
        %v238 = vunpack.c.l.u8.bf16 %v235
        %v239 = vunpack.c.l.u8.bf16 %v236
        %v240 = vunpack.c.l.u8.bf16 %v237
        %v241 = vld [vmem:[%s2] sm:$0xf]
        %v242 = vld [vmem:[%s2 + $0x4] sm:$0xf]
        %v246 = vunpack.c.l.b16 %v238
        %v247 = vunpack.c.l.b16 %v239
        %v248 = vunpack.c.l.b16 %v240
        %v249 = vpack.c.b16 %v247, %v246
        %v250 = vpack.c.b16 %v248, %v248
        %v255 = vunpack.c.l.b16 %v231
        %v256 = vunpack.c.l.b16 %v232
        %v257 = vunpack.c.l.b16 %v233
        %v258 = vunpack.c.l.b16 %v234
        %v259 = vpack.c.b16 %v256, %v255
        %v260 = vpack.c.b16 %v258, %v257
        %vm262 = vcmask 228352
        %v264 = vsel %vm262, %v249, 0
        %v267 = vsel %vm262, %v250, 0
        %vm269 = vcmask 1045504
        %v271 = vsel %vm269, %v260, 0
        %273 = vmatprep.subr.bf16.mxu0 0
        %274 = vmatpush1.bf16.msra.mxu0 %v259
        %275 = vmatprep.subr.bf16.mxu0 0
        %276 = vmatpush1.bf16.msra.mxu0 %v271
        %277 = vmatprep.subr.bf16.mxu0 0
        %278 = vmatpush1.bf16.msra.mxu0 0
        %279 = vmatprep.subr.bf16.mxu0 0
        %280 = vmatpush1.bf16.msra.mxu0 0
        %281 = vmatprep.subr.bf16.mxu0 0
        %282 = vmatpush1.bf16.msra.mxu0 0
        %283 = vmatprep.subr.bf16.mxu0 0
        %284 = vmatpush1.bf16.msra.mxu0 0
        %285 = vmatprep.subr.bf16.mxu0 0
        %286 = vmatpush1.bf16.msra.mxu0 0
        %287 = vmatprep.subr.bf16.mxu0 0
        %288 = vmatpush1.bf16.msra.mxu0 0
        %289 = vmatprep.subr.bf16.mxu0 0
        %290 = vmatpush1.bf16.msra.mxu0 0
        %291 = vmatprep.subr.bf16.mxu0 0
        %292 = vmatpush1.bf16.msra.mxu0 0
        %293 = vmatprep.subr.bf16.mxu0 0
        %294 = vmatpush1.bf16.msra.mxu0 0
        %295 = vmatprep.subr.bf16.mxu0 0
        %296 = vmatpush1.bf16.msra.mxu0 0
        %297 = vmatprep.subr.bf16.mxu0 0
        %298 = vmatpush1.bf16.msra.mxu0 0
        %299 = vmatprep.subr.bf16.mxu0 0
        %300 = vmatpush1.bf16.msra.mxu0 0
        %301 = vmatprep.subr.bf16.mxu0 0
        %302 = vmatpush1.bf16.msra.mxu0 0
        %303 = vmatprep.subr.bf16.mxu0 0
        %304 = vmatpush1.bf16.msra.mxu0 0
        %305 = vmatprep.mubr.bf16.mxu0 0
        %306 = vmatmul.mubr.bf16.gmra.mrb[0].mxu0 %v264
        %v307 = vpop.f32.mrb[0].mxu0
        %v308 = vadd.f32 0.0, %v307
        %v309 = vpop.f32.mrb[0].mxu0
        %v310 = vpop.f32.mrb[0].mxu0
        %v311 = vadd.f32 0.0, %v310
        %v312 = vpop.f32.mrb[0].mxu0
        %313 = vmatprep.mubr.bf16.mxu0 0
        %314 = vmatmul.mubr.bf16.gmra.mrb[0].mxu0 %v267
        %v315 = vpop.f32.mrb[0].mxu0
        %v316 = vadd.f32 0.0, %v315
        %v317 = vpop.f32.mrb[0].mxu0
        %v318 = vpop.f32.mrb[0].mxu0
        %v319 = vpop.f32.mrb[0].mxu0
        %320 = vdwg.mxu0
        %v321 = vpack.c.bf16 %v311, %v308
        %v322 = vpack.c.bf16 %v316, %v316
        %s323 = sld [smem:[#allocation2]]
        %v324 = vstv %s323
        %v327 = vunpack.c.l.b16 %v241
        %v328 = vunpack.c.l.b16 %v242
        %v329 = vpack.c.b16 %v328, %v327
        %vm330 = vcmask 162816
        %v332 = vsel %vm330, %v329, 0
        %vm334 = vcmask 1041408
        %v336 = vsel %vm334, %v322, 0
        %338 = vmatprep.subr.bf16.mxu0 0
        %339 = vmatpush1.bf16.msra.mxu0 %v321
        %340 = vmatprep.subr.bf16.mxu0 0
        %341 = vmatpush1.bf16.msra.mxu0 %v336
        %342 = vmatprep.subr.bf16.mxu0 0
        %343 = vmatpush1.bf16.msra.mxu0 0
        %344 = vmatprep.subr.bf16.mxu0 0
        %345 = vmatpush1.bf16.msra.mxu0 0
        %346 = vmatprep.subr.bf16.mxu0 0
        %347 = vmatpush1.bf16.msra.mxu0 0
        %348 = vmatprep.subr.bf16.mxu0 0
        %349 = vmatpush1.bf16.msra.mxu0 0
        %350 = vmatprep.subr.bf16.mxu0 0
        %351 = vmatpush1.bf16.msra.mxu0 0
        %352 = vmatprep.subr.bf16.mxu0 0
        %353 = vmatpush1.bf16.msra.mxu0 0
        %354 = vmatprep.subr.bf16.mxu0 0
        %355 = vmatpush1.bf16.msra.mxu0 0
        %356 = vmatprep.subr.bf16.mxu0 0
        %357 = vmatpush1.bf16.msra.mxu0 0
        %358 = vmatprep.subr.bf16.mxu0 0
        %359 = vmatpush1.bf16.msra.mxu0 0
        %360 = vmatprep.subr.bf16.mxu0 0
        %361 = vmatpush1.bf16.msra.mxu0 0
        %362 = vmatprep.subr.bf16.mxu0 0
        %363 = vmatpush1.bf16.msra.mxu0 0
        %364 = vmatprep.subr.bf16.mxu0 0
        %365 = vmatpush1.bf16.msra.mxu0 0
        %366 = vmatprep.subr.bf16.mxu0 0
        %367 = vmatpush1.bf16.msra.mxu0 0
        %368 = vmatprep.subr.bf16.mxu0 0
        %369 = vmatpush1.bf16.msra.mxu0 0
        %370 = vmatprep.mubr.bf16.mxu0 0
        %371 = vmatmul.mubr.bf16.gmra.mrb[0].mxu0 %v332
        %v372 = vpop.f32.mrb[0].mxu0
        %v373 = vadd.f32 %v324, %v372
        %v374 = vpop.f32.mrb[0].mxu0
        %v375 = vpop.f32.mrb[0].mxu0
        %v376 = vadd.f32 %v324, %v375
        %v377 = vpop.f32.mrb[0].mxu0
        %378 = vdwg.mxu0
        %vm379 = vcmask 130048
        %380 = vst.msk [vmem:[%s229] sm:$0xff] %vm379, %v373
        %381 = vst.msk [vmem:[%s229 + $0x8] sm:$0xff] %vm379, %v376
        %s382 = scalar_lea.vmem %s204, 6 [#allocation6]
        %v383 = vld [vmem:[%s382] sm:$0x3]
        %v384 = vld [vmem:[%s382 + $0x2] sm:$0x3]
        %v385 = vld [vmem:[%s382 + $0x4] sm:$0x1]
        %v386 = vunpack.c.l.u8.bf16 %v383
        %v387 = vunpack.c.l.u8.bf16 %v384
        %v388 = vunpack.c.l.u8.bf16 %v385
        %s389 = scalar_lea.vmem %s2, 8
        %v390 = vld [vmem:[%s389] sm:$0xf]
        %v391 = vld [vmem:[%s389 + $0x4] sm:$0xf]
        %v395 = vunpack.c.l.b16 %v386
        %v396 = vunpack.c.l.b16 %v387
        %v397 = vunpack.c.l.b16 %v388
        %v398 = vpack.c.b16 %v396, %v395
        %v399 = vpack.c.b16 %v397, %v397
        %v401 = vsel %vm262, %v398, 0
        %v404 = vsel %vm262, %v399, 0
        %406 = vmatprep.subr.bf16.mxu0 0
        %407 = vmatpush1.bf16.msra.mxu0 %v259
        %408 = vmatprep.subr.bf16.mxu0 0
        %409 = vmatpush1.bf16.msra.mxu0 %v271
        %410 = vmatprep.subr.bf16.mxu0 0
        %411 = vmatpush1.bf16.msra.mxu0 0
        %412 = vmatprep.subr.bf16.mxu0 0
        %413 = vmatpush1.bf16.msra.mxu0 0
        %414 = vmatprep.subr.bf16.mxu0 0
        %415 = vmatpush1.bf16.msra.mxu0 0
        %416 = vmatprep.subr.bf16.mxu0 0
        %417 = vmatpush1.bf16.msra.mxu0 0
        %418 = vmatprep.subr.bf16.mxu0 0
        %419 = vmatpush1.bf16.msra.mxu0 0
        %420 = vmatprep.subr.bf16.mxu0 0
        %421 = vmatpush1.bf16.msra.mxu0 0
        %422 = vmatprep.subr.bf16.mxu0 0
        %423 = vmatpush1.bf16.msra.mxu0 0
        %424 = vmatprep.subr.bf16.mxu0 0
        %425 = vmatpush1.bf16.msra.mxu0 0
        %426 = vmatprep.subr.bf16.mxu0 0
        %427 = vmatpush1.bf16.msra.mxu0 0
        %428 = vmatprep.subr.bf16.mxu0 0
        %429 = vmatpush1.bf16.msra.mxu0 0
        %430 = vmatprep.subr.bf16.mxu0 0
        %431 = vmatpush1.bf16.msra.mxu0 0
        %432 = vmatprep.subr.bf16.mxu0 0
        %433 = vmatpush1.bf16.msra.mxu0 0
        %434 = vmatprep.subr.bf16.mxu0 0
        %435 = vmatpush1.bf16.msra.mxu0 0
        %436 = vmatprep.subr.bf16.mxu0 0
        %437 = vmatpush1.bf16.msra.mxu0 0
        %438 = vmatprep.mubr.bf16.mxu0 0
        %439 = vmatmul.mubr.bf16.gmra.mrb[0].mxu0 %v401
        %v440 = vpop.f32.mrb[0].mxu0
        %v441 = vadd.f32 0.0, %v440
        %v442 = vpop.f32.mrb[0].mxu0
        %v443 = vpop.f32.mrb[0].mxu0
        %v444 = vadd.f32 0.0, %v443
        %v445 = vpop.f32.mrb[0].mxu0
        %446 = vmatprep.mubr.bf16.mxu0 0
        %447 = vmatmul.mubr.bf16.gmra.mrb[0].mxu0 %v404
        %v448 = vpop.f32.mrb[0].mxu0
        %v449 = vadd.f32 0.0, %v448
        %v450 = vpop.f32.mrb[0].mxu0
        %v451 = vpop.f32.mrb[0].mxu0
        %v452 = vpop.f32.mrb[0].mxu0
        %453 = vdwg.mxu0
        %v454 = vpack.c.bf16 %v444, %v441
        %v455 = vpack.c.bf16 %v449, %v449
        %s456 = sld [smem:[#allocation2 + $0x1]]
        %v457 = vstv %s456
        %v460 = vunpack.c.l.b16 %v390
        %v461 = vunpack.c.l.b16 %v391
        %v462 = vpack.c.b16 %v461, %v460
        %v464 = vsel %vm330, %v462, 0
        %v467 = vsel %vm334, %v455, 0
        %469 = vmatprep.subr.bf16.mxu0 0
        %470 = vmatpush1.bf16.msra.mxu0 %v454
        %471 = vmatprep.subr.bf16.mxu0 0
        %472 = vmatpush1.bf16.msra.mxu0 %v467
        %473 = vmatprep.subr.bf16.mxu0 0
        %474 = vmatpush1.bf16.msra.mxu0 0
        %475 = vmatprep.subr.bf16.mxu0 0
        %476 = vmatpush1.bf16.msra.mxu0 0
        %477 = vmatprep.subr.bf16.mxu0 0
        %478 = vmatpush1.bf16.msra.mxu0 0
        %479 = vmatprep.subr.bf16.mxu0 0
        %480 = vmatpush1.bf16.msra.mxu0 0
        %481 = vmatprep.subr.bf16.mxu0 0
        %482 = vmatpush1.bf16.msra.mxu0 0
        %483 = vmatprep.subr.bf16.mxu0 0
        %484 = vmatpush1.bf16.msra.mxu0 0
        %485 = vmatprep.subr.bf16.mxu0 0
        %486 = vmatpush1.bf16.msra.mxu0 0
        %487 = vmatprep.subr.bf16.mxu0 0
        %488 = vmatpush1.bf16.msra.mxu0 0
        %489 = vmatprep.subr.bf16.mxu0 0
        %490 = vmatpush1.bf16.msra.mxu0 0
        %491 = vmatprep.subr.bf16.mxu0 0
        %492 = vmatpush1.bf16.msra.mxu0 0
        %493 = vmatprep.subr.bf16.mxu0 0
        %494 = vmatpush1.bf16.msra.mxu0 0
        %495 = vmatprep.subr.bf16.mxu0 0
        %496 = vmatpush1.bf16.msra.mxu0 0
        %497 = vmatprep.subr.bf16.mxu0 0
        %498 = vmatpush1.bf16.msra.mxu0 0
        %499 = vmatprep.subr.bf16.mxu0 0
        %500 = vmatpush1.bf16.msra.mxu0 0
        %501 = vmatprep.mubr.bf16.mxu0 0
        %502 = vmatmul.mubr.bf16.gmra.mrb[0].mxu0 %v464
        %v503 = vpop.f32.mrb[0].mxu0
        %v504 = vadd.f32 %v457, %v503
        %v505 = vpop.f32.mrb[0].mxu0
        %v506 = vpop.f32.mrb[0].mxu0
        %v507 = vadd.f32 %v457, %v506
        %v508 = vpop.f32.mrb[0].mxu0
        %509 = vdwg.mxu0
        %s510 = scalar_lea.vmem %s229, 16 [#allocation7]
        %511 = vst.msk [vmem:[%s510] sm:$0xff] %vm379, %v504
        %512 = vst.msk [vmem:[%s510 + $0x8] sm:$0xff] %vm379, %v507
        %s513 = scalar_lea.vmem %s204, 12 [#allocation6]
        %v514 = vld [vmem:[%s513] sm:$0x3]
        %v515 = vld [vmem:[%s513 + $0x2] sm:$0x3]
        %v516 = vld [vmem:[%s513 + $0x4] sm:$0x1]
        %v517 = vunpack.c.l.u8.bf16 %v514
        %v518 = vunpack.c.l.u8.bf16 %v515
        %v519 = vunpack.c.l.u8.bf16 %v516
        %s520 = scalar_lea.vmem %s2, 16
        %v521 = vld [vmem:[%s520] sm:$0xf]
        %v522 = vld [vmem:[%s520 + $0x4] sm:$0xf]
        %v526 = vunpack.c.l.b16 %v517
        %v527 = vunpack.c.l.b16 %v518
        %v528 = vunpack.c.l.b16 %v519
        %v529 = vpack.c.b16 %v527, %v526
        %v530 = vpack.c.b16 %v528, %v528
        %v532 = vsel %vm262, %v529, 0
        %v535 = vsel %vm262, %v530, 0
        %537 = vmatprep.subr.bf16.mxu0 0
        %538 = vmatpush1.bf16.msra.mxu0 %v259
        %539 = vmatprep.subr.bf16.mxu0 0
        %540 = vmatpush1.bf16.msra.mxu0 %v271
        %541 = vmatprep.subr.bf16.mxu0 0
        %542 = vmatpush1.bf16.msra.mxu0 0
        %543 = vmatprep.subr.bf16.mxu0 0
        %544 = vmatpush1.bf16.msra.mxu0 0
        %545 = vmatprep.subr.bf16.mxu0 0
        %546 = vmatpush1.bf16.msra.mxu0 0
        %547 = vmatprep.subr.bf16.mxu0 0
        %548 = vmatpush1.bf16.msra.mxu0 0
        %549 = vmatprep.subr.bf16.mxu0 0
        %550 = vmatpush1.bf16.msra.mxu0 0
        %551 = vmatprep.subr.bf16.mxu0 0
        %552 = vmatpush1.bf16.msra.mxu0 0
        %553 = vmatprep.subr.bf16.mxu0 0
        %554 = vmatpush1.bf16.msra.mxu0 0
        %555 = vmatprep.subr.bf16.mxu0 0
        %556 = vmatpush1.bf16.msra.mxu0 0
        %557 = vmatprep.subr.bf16.mxu0 0
        %558 = vmatpush1.bf16.msra.mxu0 0
        %559 = vmatprep.subr.bf16.mxu0 0
        %560 = vmatpush1.bf16.msra.mxu0 0
        %561 = vmatprep.subr.bf16.mxu0 0
        %562 = vmatpush1.bf16.msra.mxu0 0
        %563 = vmatprep.subr.bf16.mxu0 0
        %564 = vmatpush1.bf16.msra.mxu0 0
        %565 = vmatprep.subr.bf16.mxu0 0
        %566 = vmatpush1.bf16.msra.mxu0 0
        %567 = vmatprep.subr.bf16.mxu0 0
        %568 = vmatpush1.bf16.msra.mxu0 0
        %569 = vmatprep.mubr.bf16.mxu0 0
        %570 = vmatmul.mubr.bf16.gmra.mrb[0].mxu0 %v532
        %v571 = vpop.f32.mrb[0].mxu0
        %v572 = vadd.f32 0.0, %v571
        %v573 = vpop.f32.mrb[0].mxu0
        %v574 = vpop.f32.mrb[0].mxu0
        %v575 = vadd.f32 0.0, %v574
        %v576 = vpop.f32.mrb[0].mxu0
        %577 = vmatprep.mubr.bf16.mxu0 0
        %578 = vmatmul.mubr.bf16.gmra.mrb[0].mxu0 %v535
        %v579 = vpop.f32.mrb[0].mxu0
        %v580 = vadd.f32 0.0, %v579
        %v581 = vpop.f32.mrb[0].mxu0
        %v582 = vpop.f32.mrb[0].mxu0
        %v583 = vpop.f32.mrb[0].mxu0
        %584 = vdwg.mxu0
        %v585 = vpack.c.bf16 %v575, %v572
        %v586 = vpack.c.bf16 %v580, %v580
        %s587 = sld [smem:[#allocation2 + $0x2]]
        %v588 = vstv %s587
        %v591 = vunpack.c.l.b16 %v521
        %v592 = vunpack.c.l.b16 %v522
        %v593 = vpack.c.b16 %v592, %v591
        %v595 = vsel %vm330, %v593, 0
        %v598 = vsel %vm334, %v586, 0
        %600 = vmatprep.subr.bf16.mxu0 0
        %601 = vmatpush1.bf16.msra.mxu0 %v585
        %602 = vmatprep.subr.bf16.mxu0 0
        %603 = vmatpush1.bf16.msra.mxu0 %v598
        %604 = vmatprep.subr.bf16.mxu0 0
        %605 = vmatpush1.bf16.msra.mxu0 0
        %606 = vmatprep.subr.bf16.mxu0 0
        %607 = vmatpush1.bf16.msra.mxu0 0
        %608 = vmatprep.subr.bf16.mxu0 0
        %609 = vmatpush1.bf16.msra.mxu0 0
        %610 = vmatprep.subr.bf16.mxu0 0
        %611 = vmatpush1.bf16.msra.mxu0 0
        %612 = vmatprep.subr.bf16.mxu0 0
        %613 = vmatpush1.bf16.msra.mxu0 0
        %614 = vmatprep.subr.bf16.mxu0 0
        %615 = vmatpush1.bf16.msra.mxu0 0
        %616 = vmatprep.subr.bf16.mxu0 0
        %617 = vmatpush1.bf16.msra.mxu0 0
        %618 = vmatprep.subr.bf16.mxu0 0
        %619 = vmatpush1.bf16.msra.mxu0 0
        %620 = vmatprep.subr.bf16.mxu0 0
        %621 = vmatpush1.bf16.msra.mxu0 0
        %622 = vmatprep.subr.bf16.mxu0 0
        %623 = vmatpush1.bf16.msra.mxu0 0
        %624 = vmatprep.subr.bf16.mxu0 0
        %625 = vmatpush1.bf16.msra.mxu0 0
        %626 = vmatprep.subr.bf16.mxu0 0
        %627 = vmatpush1.bf16.msra.mxu0 0
        %628 = vmatprep.subr.bf16.mxu0 0
        %629 = vmatpush1.bf16.msra.mxu0 0
        %630 = vmatprep.subr.bf16.mxu0 0
        %631 = vmatpush1.bf16.msra.mxu0 0
        %632 = vmatprep.mubr.bf16.mxu0 0
        %633 = vmatmul.mubr.bf16.gmra.mrb[0].mxu0 %v595
        %v634 = vpop.f32.mrb[0].mxu0
        %v635 = vadd.f32 %v588, %v634
        %v636 = vpop.f32.mrb[0].mxu0
        %v637 = vpop.f32.mrb[0].mxu0
        %v638 = vadd.f32 %v588, %v637
        %v639 = vpop.f32.mrb[0].mxu0
        %640 = vdwg.mxu0
        %s641 = scalar_lea.vmem %s229, 32 [#allocation7]
        %642 = vst.msk [vmem:[%s641] sm:$0xff] %vm379, %v635
        %643 = vst.msk [vmem:[%s641 + $0x8] sm:$0xff] %vm379, %v638
        %s644 = sand.u32 %s119, 1
        %s645 = scalar_lea.sflag [#allocation4], %s644
        %s646 = sand.u32 %s119, 1
        %s647 = smul.addr %s646, 48
        %s648 = scalar_lea.vmem [#allocation7], %s647
        // Predicated region
        $region45: #{tpu_custom_call.1} parent=35 // pred_check
          %p649 = pneg %p129
        $region46: #{tpu_custom_call.1} parent=35 // pred_check_branch
          %651 = sbr.rel (%p649) target = $region48
        $region47: #{tpu_custom_call.1} parent=35 // pred_region
          %s653 = ssub.s32 768, 768
          %654 = vsyncadd %s645, %s653
          %s655 = smul.addr %s22, 6
          %s656 = smul.addr %s655, 128
          %s657 = scalar_lea.hbm %s4, %s656
          %s658 = sshll.u32 %s648, 4
          %s659 = int_to_ptr.vmem [resolvable:$true] %s658
          %664 = dma.vmem_to_hbm [thread:$0]  %s659, 768, %s657, %s645, 128, 128, 8
        $region48: #{tpu_custom_call.1} parent=35 // pred_fallthru
          _
      $region36: #{tpu_custom_call.1} parent=5 // pred_fallthru
        _
      %p665 = scmp.le.s32.totalorder 2, %s17
      // Predicated region
      $region49: #{tpu_custom_call.1} parent=5 // pred_check
        %p666 = pneg %p665
      $region50: #{tpu_custom_call.1} parent=5 // pred_check_branch
        %668 = sbr.rel (%p666) target = $region52
      $region51: #{tpu_custom_call.1} parent=5 // pred_region
        %s669 = ssub.s32 %s17, 2
        // Predicated region
        $region53: #{tpu_custom_call.1} parent=51 // pred_check
          %p670 = pneg %p135
        $region54: #{tpu_custom_call.1} parent=51 // pred_check_branch
          %672 = sbr.rel (%p670) target = $region56
        $region55: #{tpu_custom_call.1} parent=51 // pred_region
          %s673 = sand.u32 %s120, 1
          %s674 = scalar_lea.sflag [#allocation4], %s673
          %s675 = sand.u32 %s120, 1
          %s676 = smul.addr %s675, 48
          %s677 = scalar_lea.vmem [#allocation7], %s676
          %678 = dma.done %s674, 768
        $region56: #{tpu_custom_call.1} parent=51 // pred_fallthru
          _
      $region52: #{tpu_custom_call.1} parent=5 // pred_fallthru
        _
    $region6: #{tpu_custom_call.1} parent=1 // loop_footer
      %s21 = sadd.s32 1, %s17
    $region7: #{tpu_custom_call.1} parent=1 // loop_footer_branch
      %16 = sbr.rel target = $region3
    $region8: #{tpu_custom_call.1} parent=1 // loop_exit
      _
    %679 = vsyncpa [#allocation3], 1
    %s680 = scalar_lea.sflag [#allocation3], 1
    %681 = vsyncpa %s680, 1
    %682 = vsyncpa [#allocation4], 1
    %s683 = scalar_lea.sflag [#allocation4], 1
    %684 = vsyncpa %s683, 1
    %685 = vsyncpa [#allocation5], 1
    %s686 = scalar_lea.sflag [#allocation5], 1
    %687 = vsyncpa %s686, 1

</llo_original>
